<compile_context>
chip_gen: v7x
topology: tpu7x:2x2x1
jax: 0.10.0
libtpu: 0.0.40
codegen_flags: <defaults>
</compile_context>

<pallas_src>
import jax
import jax.numpy as jnp
from jax import lax
from jax.experimental import pallas as pl
from jax.experimental.pallas import tpu as pltpu

LN_EPS = 1e-5


def _up8(x):
    return ((x + 7) // 8) * 8


def _slab_layout(S, A, H):
    """Row offsets of each parameter band in the packed slab (8-row aligned)."""
    off_w1s = 0                       # rows [0, S)            : w1 state half
    off_w1a = _up8(S)                 # rows [off, off+A)      : w1 action half
    off_w2 = off_w1a + _up8(A)        # rows [off, off+H)      : folded w2
    off_vec = off_w2 + _up8(H)        # 8-row band of 1-row vectors:
                                      #   +0: b1, +1: b2_folded, +2: w3 row,
                                      #   +3: b3 broadcast across H
    total = off_vec + 8
    return off_w1s, off_w1a, off_w2, off_vec, total


def critic_forward(state, action, params):
    """state: (B, S), action: (B, A)  ->  Q-value (B, 1)."""
    B = state.shape[0]
    S, A, H = params["dims"]
    off_w1s, off_w1a, off_w2, off_vec, _ = _slab_layout(S, A, H)
    inv_h = 1.0 / float(H)

    def kernel(s_ref, a_ref, slab_ref, o_ref):
        # Static slices of the single param slab (aligned bands).
        w1s = slab_ref[off_w1s:off_w1s + S, :]          # (S, H)
        w1a = slab_ref[off_w1a:off_w1a + A, :]          # (A, H)
        w2 = slab_ref[off_w2:off_w2 + H, :]             # (H, H), LN affine folded
        vec = slab_ref[off_vec:off_vec + 8, :]          # (8, H) vector band
        b1 = vec[0:1, :]                                # (1, H)
        b2 = vec[1:2, :]                                # (1, H), LN beta folded
        w3 = vec[2:3, :]                                # (1, H)
        b3 = vec[3:4, 0:1]                              # (1, 1)

        # ---- Linear 1 (concat fused): h = state @ w1_s + action @ w1_a + b1 ----
        h = (jnp.dot(s_ref[...], w1s, preferred_element_type=jnp.float32)
             + jnp.dot(a_ref[...], w1a, preferred_element_type=jnp.float32)
             + b1)

        # ---- LayerNorm (affine folded into w2/b2) ----
        # Two independent XLU reduces overlap; rsqrt goes to the EUP slot.
        s1 = jnp.sum(h, axis=-1, keepdims=True)
        s2 = jnp.sum(h * h, axis=-1, keepdims=True)
        mu = s1 * inv_h
        var = s2 * inv_h - mu * mu
        hn = (h - mu) * lax.rsqrt(var + LN_EPS)

        # ---- Linear 2 (+ folded gamma/beta) + ReLU ----
        h2 = jnp.dot(hn, w2, preferred_element_type=jnp.float32) + b2
        h2 = jnp.maximum(h2, 0.0)

        # ---- Linear 3 as VPU mul + XLU reduce (w3 is a (1, H) row) ----
        out = jnp.sum(h2 * w3, axis=-1, keepdims=True) + b3
        o_ref[...] = out.astype(o_ref.dtype)

    vmem = pl.BlockSpec(memory_space=pltpu.MemorySpace.VMEM)
    return pl.pallas_call(
        kernel,
        out_shape=jax.ShapeDtypeStruct((B, 1), jnp.float32),
        in_specs=[vmem, vmem, vmem],
        out_specs=vmem,
    )(state, action, params["slab"])


def init_critic_params(key, state_dim, action_dim, hidden_dim=32):
    """PyTorch-default-like init; params packed into one kernel-friendly slab.

    The slab folds the LayerNorm affine into Linear 2:
        w2_folded = gamma * w2 (row scale), b2_folded = beta @ w2 + b2
    and stores w1 pre-split so the kernel fuses the state/action concat.
    Raw (unfolded) params are kept under "ref" for the reference check.
    """
    S, A, H = state_dim, action_dim, hidden_dim

    def linear_init(k, fan_in, fan_out):
        kw, kb = jax.random.split(k)
        bound = 1.0 / (fan_in ** 0.5)
        w = jax.random.uniform(kw, (fan_in, fan_out), jnp.float32, -bound, bound)
        b = jax.random.uniform(kb, (1, fan_out), jnp.float32, -bound, bound)
        return w, b

    k1, k2, k3 = jax.random.split(key, 3)
    w1, b1 = linear_init(k1, S + A, H)
    w2, b2 = linear_init(k2, H, H)
    w3, b3 = linear_init(k3, H, 1)
    ln_g = jnp.ones((1, H), jnp.float32)
    ln_b = jnp.zeros((1, H), jnp.float32)

    # Fold LayerNorm affine into Linear 2 (init-time transform).
    w2f = ln_g.T * w2                    # (H, 1) * (H, H): scale rows by gamma
    b2f = ln_b @ w2 + b2                 # (1, H)

    off_w1s, off_w1a, off_w2, off_vec, total = _slab_layout(S, A, H)
    slab = jnp.zeros((total, H), jnp.float32)
    slab = slab.at[off_w1s:off_w1s + S].set(w1[:S])
    slab = slab.at[off_w1a:off_w1a + A].set(w1[S:])
    slab = slab.at[off_w2:off_w2 + H].set(w2f)
    slab = slab.at[off_vec + 0].set(b1[0])
    slab = slab.at[off_vec + 1].set(b2f[0])
    slab = slab.at[off_vec + 2].set(w3[:, 0])
    slab = slab.at[off_vec + 3].set(jnp.full((H,), b3[0, 0], jnp.float32))

    return {
        "slab": slab,
        "dims": (S, A, H),
        # Unfolded params, only used by the pure-JAX reference.
        "ref": {"w1": w1, "b1": b1, "ln_g": ln_g, "ln_b": ln_b,
                "w2": w2, "b2": b2, "w3": w3, "b3": b3},
    }


def _reference(state, action, params):
    """Pure-JAX reference matching the PyTorch module (unfolded params)."""
    p = params["ref"]
    x = jnp.concatenate([state, action], axis=-1)
    h = x @ p["w1"] + p["b1"]
    mu = h.mean(-1, keepdims=True)
    var = ((h - mu) ** 2).mean(-1, keepdims=True)
    h = (h - mu) / jnp.sqrt(var + LN_EPS) * p["ln_g"] + p["ln_b"]
    h = jnp.maximum(h @ p["w2"] + p["b2"], 0.0)
    return h @ p["w3"] + p["b3"]


if __name__ == "__main__":
    B, STATE_DIM, ACTION_DIM, HIDDEN_DIM = 8, 17, 6, 32

    key = jax.random.PRNGKey(0)
    kp, ks, ka = jax.random.split(key, 3)
    params = init_critic_params(kp, STATE_DIM, ACTION_DIM, HIDDEN_DIM)
    state = jax.random.normal(ks, (B, STATE_DIM), jnp.float32)
    action = jax.random.normal(ka, (B, ACTION_DIM), jnp.float32)

    q = critic_forward(state, action, params)
    q = jax.block_until_ready(q)

    q_ref = _reference(state, action, params)
    assert q.shape == (B, 1)
    assert jnp.allclose(q, q_ref, atol=1e-4, rtol=1e-4), (q, q_ref)
    print("KERNEL_OK")
</pallas_src>

<mosaic_0001>
module attributes {stable_mosaic.version = 11 : i64} {
  func.func @kernel(%arg0: memref<8x17xf32, #tpu.memory_space<vmem>>, %arg1: memref<8x6xf32, #tpu.memory_space<vmem>>, %arg2: memref<72x32xf32, #tpu.memory_space<vmem>>, %arg3: memref<8x1xf32, #tpu.memory_space<vmem>>) attributes {dimension_semantics = [], scalar_prefetch = 0 : i64, scratch_operands = 0 : i64, tpu.core_type = #tpu.core_type<tc>} {
    %c0 = arith.constant 0 : index
    %c0_0 = arith.constant 0 : index
    %0 = vector.load %arg2[%c0, %c0_0] : memref<72x32xf32, #tpu.memory_space<vmem>>, vector<17x32xf32>
    %c24 = arith.constant 24 : index
    %c0_1 = arith.constant 0 : index
    %1 = vector.load %arg2[%c24, %c0_1] : memref<72x32xf32, #tpu.memory_space<vmem>>, vector<6x32xf32>
    %c32 = arith.constant 32 : index
    %c0_2 = arith.constant 0 : index
    %2 = vector.load %arg2[%c32, %c0_2] : memref<72x32xf32, #tpu.memory_space<vmem>>, vector<32x32xf32>
    %c64 = arith.constant 64 : index
    %c0_3 = arith.constant 0 : index
    %3 = vector.load %arg2[%c64, %c0_3] : memref<72x32xf32, #tpu.memory_space<vmem>>, vector<8x32xf32>
    %4 = vector.extract_strided_slice %3 {offsets = [0, 0], sizes = [1, 32], strides = [1, 1]} : vector<8x32xf32> to vector<1x32xf32>
    %5 = vector.extract_strided_slice %3 {offsets = [1, 0], sizes = [1, 32], strides = [1, 1]} : vector<8x32xf32> to vector<1x32xf32>
    %6 = vector.extract_strided_slice %3 {offsets = [2, 0], sizes = [1, 32], strides = [1, 1]} : vector<8x32xf32> to vector<1x32xf32>
    %7 = vector.extract_strided_slice %3 {offsets = [3, 0], sizes = [1, 1], strides = [1, 1]} : vector<8x32xf32> to vector<1x1xf32>
    %c0_4 = arith.constant 0 : index
    %c0_5 = arith.constant 0 : index
    %8 = vector.load %arg0[%c0_4, %c0_5] : memref<8x17xf32, #tpu.memory_space<vmem>>, vector<8x17xf32>
    %cst = arith.constant dense<0.000000e+00> : vector<8x32xf32>
    %9 = tpu.matmul %8, %0, %cst {dimension_numbers = #tpu.dot_dimension_numbers<[1], [0], [0], [1], [0, 0, 1, 1], [], []>} : vector<8x17xf32>, vector<17x32xf32>, vector<8x32xf32> -> vector<8x32xf32>
    %c0_6 = arith.constant 0 : index
    %c0_7 = arith.constant 0 : index
    %10 = vector.load %arg1[%c0_6, %c0_7] : memref<8x6xf32, #tpu.memory_space<vmem>>, vector<8x6xf32>
    %cst_8 = arith.constant dense<0.000000e+00> : vector<8x32xf32>
    %11 = tpu.matmul %10, %1, %cst_8 {dimension_numbers = #tpu.dot_dimension_numbers<[1], [0], [0], [1], [0, 0, 1, 1], [], []>} : vector<8x6xf32>, vector<6x32xf32>, vector<8x32xf32> -> vector<8x32xf32>
    %12 = arith.addf %9, %11 : vector<8x32xf32>
    %13 = vector.broadcast %4 : vector<1x32xf32> to vector<8x32xf32>
    %14 = arith.addf %12, %13 : vector<8x32xf32>
    %cst_9 = arith.constant dense<0.000000e+00> : vector<8xf32>
    %15 = vector.multi_reduction <add>, %14, %cst_9 [1] : vector<8x32xf32> to vector<8xf32>
    %16 = vector.shape_cast %15 : vector<8xf32> to vector<8x1xf32>
    %17 = arith.mulf %14, %14 : vector<8x32xf32>
    %cst_10 = arith.constant dense<0.000000e+00> : vector<8xf32>
    %18 = vector.multi_reduction <add>, %17, %cst_10 [1] : vector<8x32xf32> to vector<8xf32>
    %19 = vector.shape_cast %18 : vector<8xf32> to vector<8x1xf32>
    %cst_11 = arith.constant 3.125000e-02 : f32
    %20 = vector.broadcast %cst_11 : f32 to vector<8x1xf32>
    %21 = arith.mulf %16, %20 : vector<8x1xf32>
    %cst_12 = arith.constant 3.125000e-02 : f32
    %22 = vector.broadcast %cst_12 : f32 to vector<8x1xf32>
    %23 = arith.mulf %19, %22 : vector<8x1xf32>
    %24 = arith.mulf %21, %21 : vector<8x1xf32>
    %25 = arith.subf %23, %24 : vector<8x1xf32>
    %26 = vector.broadcast %21 : vector<8x1xf32> to vector<8x32xf32>
    %27 = arith.subf %14, %26 : vector<8x32xf32>
    %cst_13 = arith.constant 9.99999974E-6 : f32
    %28 = vector.broadcast %cst_13 : f32 to vector<8x1xf32>
    %29 = arith.addf %25, %28 : vector<8x1xf32>
    %30 = math.rsqrt %29 : vector<8x1xf32>
    %31 = vector.broadcast %30 : vector<8x1xf32> to vector<8x32xf32>
    %32 = arith.mulf %27, %31 : vector<8x32xf32>
    %cst_14 = arith.constant dense<0.000000e+00> : vector<8x32xf32>
    %33 = tpu.matmul %32, %2, %cst_14 {dimension_numbers = #tpu.dot_dimension_numbers<[1], [0], [0], [1], [0, 0, 1, 1], [], []>} : vector<8x32xf32>, vector<32x32xf32>, vector<8x32xf32> -> vector<8x32xf32>
    %34 = vector.broadcast %5 : vector<1x32xf32> to vector<8x32xf32>
    %35 = arith.addf %33, %34 : vector<8x32xf32>
    %cst_15 = arith.constant 0.000000e+00 : f32
    %36 = vector.broadcast %cst_15 : f32 to vector<8x32xf32>
    %37 = arith.maximumf %35, %36 : vector<8x32xf32>
    %38 = vector.broadcast %6 : vector<1x32xf32> to vector<8x32xf32>
    %39 = arith.mulf %37, %38 : vector<8x32xf32>
    %cst_16 = arith.constant dense<0.000000e+00> : vector<8xf32>
    %40 = vector.multi_reduction <add>, %39, %cst_16 [1] : vector<8x32xf32> to vector<8xf32>
    %41 = vector.shape_cast %40 : vector<8xf32> to vector<8x1xf32>
    %42 = vector.broadcast %7 : vector<1x1xf32> to vector<8x1xf32>
    %43 = arith.addf %41, %42 : vector<8x1xf32>
    %c0_17 = arith.constant 0 : index
    %c0_18 = arith.constant 0 : index
    %44 = vector.load %arg3[%c0_17, %c0_18] : memref<8x1xf32, #tpu.memory_space<vmem>>, vector<8x1xf32>
    tpu.vector_store %arg3[%c0_17, %c0_18], %43 {strides = array<i32>} : memref<8x1xf32, #tpu.memory_space<vmem>>, vector<8x1xf32>,
    return
  }
}

</mosaic_0001>

<llo_original>
// kernel: tpu_custom_call.1
$region0: #{tpu_custom_call.1}
  #allocation0 [shape = 'u32[]', space=smem, size = 0x4, offset = 0x4, fixed_abs, tag = 'smem constant byte address 0x4 - core index']
  #allocation1 [shape = 'u32[144,128]{1,0:T(1,128)}', space=vmem, size = 0x12000, scoped, tag = 'internal scratch']
  %s0 = inlined_call_operand.vmem [shape: f32[8,17], index: 0, kind: input, shape index: {}]
  %s1 = inlined_call_operand.vmem [shape: f32[8,6], index: 1, kind: input, shape index: {}]
  %s2 = inlined_call_operand.vmem [shape: f32[72,32], index: 2, kind: input, shape index: {}]
  %s3 = inlined_call_operand.vmem [shape: f32[8,1], index: 3, kind: output, shape index: {}]
  %s4 = sld [smem:[#allocation0]]
  $region22: #{tpu_custom_call.1} parent=0
    _
  %s6 = ssub.s32 1, %s4
  %s7 = scalar_select 0, %s6, %s4
  // Predicated region
  $region2: #{tpu_custom_call.1} parent=0 // pred_check
    _
  $region3: #{tpu_custom_call.1} parent=0 // pred_check_branch
    %9 = sbr.rel (0) target = $region5
  $region4: #{tpu_custom_call.1} parent=0 // pred_region
    _
  $region5: #{tpu_custom_call.1} parent=0 // pred_fallthru
    _
  // Predicated region
  $region6: #{tpu_custom_call.1} parent=0 // pred_check
    _
  $region7: #{tpu_custom_call.1} parent=0 // pred_check_branch
    %11 = sbr.rel (0) target = $region9
  $region8: #{tpu_custom_call.1} parent=0 // pred_region
    _
  $region9: #{tpu_custom_call.1} parent=0 // pred_fallthru
    _
  // Predicated region
  $region10: #{tpu_custom_call.1} parent=0 // pred_check
    _
  $region11: #{tpu_custom_call.1} parent=0 // pred_check_branch
    %13 = sbr.rel (0) target = $region13
  $region12: #{tpu_custom_call.1} parent=0 // pred_region
    _
  $region13: #{tpu_custom_call.1} parent=0 // pred_fallthru
    _
  %v14 = vld [vmem:[%s2] sm:$0xff]
  %v15 = vld [vmem:[%s2 + $0x8] sm:$0xff]
  %v16 = vld [vmem:[%s2 + $0x10] sm:$0x1]
  %v17 = vld [vmem:[%s2 + $0x18] sm:$0x3f]
  %v18 = vld [vmem:[%s2 + $0x20] sm:$0xff]
  %v19 = vld [vmem:[%s2 + $0x28] sm:$0xff]
  %v20 = vld [vmem:[%s2 + $0x30] sm:$0xff]
  %v21 = vld [vmem:[%s2 + $0x38] sm:$0xff]
  %v22 = vld [vmem:[%s2 + $0x40] sm:$0xff]
  %v23 = vld [vmem:[%s0] sm:$0xff]
  %v24 = vld [vmem:[%s1] sm:$0xff]
  %vm25 = vcmask 48128
  %v27 = vsel %vm25, %v24, 0
  %vm29 = vcmask 1045504
  %v31 = vsel %vm29, %v17, 0
  %33 = vmatprep.subr.mxu0 0.0
  %34 = vmatpush1.msra.mxu0 %v31
  %35 = vmatprep.subr.mxu0 0.0
  %36 = vmatpush1.msra.mxu0 0.0
  %37 = vmatprep.subr.mxu0 0.0
  %38 = vmatpush1.msra.mxu0 0.0
  %39 = vmatprep.subr.mxu0 0.0
  %40 = vmatpush1.msra.mxu0 0.0
  %41 = vmatprep.subr.mxu0 0.0
  %42 = vmatpush1.msra.mxu0 0.0
  %43 = vmatprep.subr.mxu0 0.0
  %44 = vmatpush1.msra.mxu0 0.0
  %45 = vmatprep.subr.mxu0 0.0
  %46 = vmatpush1.msra.mxu0 0.0
  %47 = vmatprep.subr.mxu0 0.0
  %48 = vmatpush1.msra.mxu0 0.0
  %49 = vmatprep.subr.mxu0 0.0
  %50 = vmatpush1.msra.mxu0 0.0
  %51 = vmatprep.subr.mxu0 0.0
  %52 = vmatpush1.msra.mxu0 0.0
  %53 = vmatprep.subr.mxu0 0.0
  %54 = vmatpush1.msra.mxu0 0.0
  %55 = vmatprep.subr.mxu0 0.0
  %56 = vmatpush1.msra.mxu0 0.0
  %57 = vmatprep.subr.mxu0 0.0
  %58 = vmatpush1.msra.mxu0 0.0
  %59 = vmatprep.subr.mxu0 0.0
  %60 = vmatpush1.msra.mxu0 0.0
  %61 = vmatprep.subr.mxu0 0.0
  %62 = vmatpush1.msra.mxu0 0.0
  %63 = vmatprep.subr.mxu0 0.0
  %64 = vmatpush1.msra.mxu0 0.0
  %65 = vmatprep.subr.mxu0 0.0
  %66 = vmatpush1.msra.mxu0 0.0
  %67 = vmatprep.subr.mxu0 0.0
  %68 = vmatpush1.msra.mxu0 0.0
  %69 = vmatprep.subr.mxu0 0.0
  %70 = vmatpush1.msra.mxu0 0.0
  %71 = vmatprep.subr.mxu0 0.0
  %72 = vmatpush1.msra.mxu0 0.0
  %73 = vmatprep.subr.mxu0 0.0
  %74 = vmatpush1.msra.mxu0 0.0
  %75 = vmatprep.subr.mxu0 0.0
  %76 = vmatpush1.msra.mxu0 0.0
  %77 = vmatprep.subr.mxu0 0.0
  %78 = vmatpush1.msra.mxu0 0.0
  %79 = vmatprep.subr.mxu0 0.0
  %80 = vmatpush1.msra.mxu0 0.0
  %81 = vmatprep.subr.mxu0 0.0
  %82 = vmatpush1.msra.mxu0 0.0
  %83 = vmatprep.subr.mxu0 0.0
  %84 = vmatpush1.msra.mxu0 0.0
  %85 = vmatprep.subr.mxu0 0.0
  %86 = vmatpush1.msra.mxu0 0.0
  %87 = vmatprep.subr.mxu0 0.0
  %88 = vmatpush1.msra.mxu0 0.0
  %89 = vmatprep.subr.mxu0 0.0
  %90 = vmatpush1.msra.mxu0 0.0
  %91 = vmatprep.subr.mxu0 0.0
  %92 = vmatpush1.msra.mxu0 0.0
  %93 = vmatprep.subr.mxu0 0.0
  %94 = vmatpush1.msra.mxu0 0.0
  %95 = vmatprep.subr.mxu0 0.0
  %96 = vmatpush1.msra.mxu0 0.0
  %97 = vmatprep.mubr.f32.mxu0 0.0
  %98 = vmatmul.mubr.f32.gmra.mrb[0].mxu0 %v27
  %v99 = vpop.f32.mrb[0].mxu0
  %v100 = vadd.f32 0.0, %v99
  %v101 = vpop.f32.mrb[0].mxu0
  %102 = vdwg.mxu0
  %vm103 = vcmask 138240
  %v105 = vsel %vm103, %v23, 0
  %vm107 = vcmask 1040384
  %v109 = vsel %vm107, %v16, 0
  %111 = vmatprep.subr.mxu0 0.0
  %112 = vmatpush1.msra.mxu0 %v14
  %113 = vmatprep.subr.mxu0 0.0
  %114 = vmatpush1.msra.mxu0 %v15
  %115 = vmatprep.subr.mxu0 0.0
  %116 = vmatpush1.msra.mxu0 %v109
  %117 = vmatprep.subr.mxu0 0.0
  %118 = vmatpush1.msra.mxu0 0.0
  %119 = vmatprep.subr.mxu0 0.0
  %120 = vmatpush1.msra.mxu0 0.0
  %121 = vmatprep.subr.mxu0 0.0
  %122 = vmatpush1.msra.mxu0 0.0
  %123 = vmatprep.subr.mxu0 0.0
  %124 = vmatpush1.msra.mxu0 0.0
  %125 = vmatprep.subr.mxu0 0.0
  %126 = vmatpush1.msra.mxu0 0.0
  %127 = vmatprep.subr.mxu0 0.0
  %128 = vmatpush1.msra.mxu0 0.0
  %129 = vmatprep.subr.mxu0 0.0
  %130 = vmatpush1.msra.mxu0 0.0
  %131 = vmatprep.subr.mxu0 0.0
  %132 = vmatpush1.msra.mxu0 0.0
  %133 = vmatprep.subr.mxu0 0.0
  %134 = vmatpush1.msra.mxu0 0.0
  %135 = vmatprep.subr.mxu0 0.0
  %136 = vmatpush1.msra.mxu0 0.0
  %137 = vmatprep.subr.mxu0 0.0
  %138 = vmatpush1.msra.mxu0 0.0
  %139 = vmatprep.subr.mxu0 0.0
  %140 = vmatpush1.msra.mxu0 0.0
  %141 = vmatprep.subr.mxu0 0.0
  %142 = vmatpush1.msra.mxu0 0.0
  %143 = vmatprep.subr.mxu0 0.0
  %144 = vmatpush1.msra.mxu0 0.0
  %145 = vmatprep.subr.mxu0 0.0
  %146 = vmatpush1.msra.mxu0 0.0
  %147 = vmatprep.subr.mxu0 0.0
  %148 = vmatpush1.msra.mxu0 0.0
  %149 = vmatprep.subr.mxu0 0.0
  %150 = vmatpush1.msra.mxu0 0.0
  %151 = vmatprep.subr.mxu0 0.0
  %152 = vmatpush1.msra.mxu0 0.0
  %153 = vmatprep.subr.mxu0 0.0
  %154 = vmatpush1.msra.mxu0 0.0
  %155 = vmatprep.subr.mxu0 0.0
  %156 = vmatpush1.msra.mxu0 0.0
  %157 = vmatprep.subr.mxu0 0.0
  %158 = vmatpush1.msra.mxu0 0.0
  %159 = vmatprep.subr.mxu0 0.0
  %160 = vmatpush1.msra.mxu0 0.0
  %161 = vmatprep.subr.mxu0 0.0
  %162 = vmatpush1.msra.mxu0 0.0
  %163 = vmatprep.subr.mxu0 0.0
  %164 = vmatpush1.msra.mxu0 0.0
  %165 = vmatprep.subr.mxu0 0.0
  %166 = vmatpush1.msra.mxu0 0.0
  %167 = vmatprep.subr.mxu0 0.0
  %168 = vmatpush1.msra.mxu0 0.0
  %169 = vmatprep.subr.mxu0 0.0
  %170 = vmatpush1.msra.mxu0 0.0
  %171 = vmatprep.subr.mxu0 0.0
  %172 = vmatpush1.msra.mxu0 0.0
  %173 = vmatprep.subr.mxu0 0.0
  %174 = vmatpush1.msra.mxu0 0.0
  %175 = vmatprep.mubr.f32.mxu0 0.0
  %176 = vmatmul.mubr.f32.gmra.mrb[0].mxu0 %v105
  %v177 = vpop.f32.mrb[0].mxu0
  %v178 = vadd.f32 %v100, %v177
  %v179 = vpop.f32.mrb[0].mxu0
  %180 = vdwg.mxu0
  %v181 = vlaneseq
  %v182 = vshrl.u32 %v181, 7
  %v183 = vsub.s32 0, %v182
  %v184 = vrot.slane %v22, %v183
  %v185 = vadd.f32 %v178, %v184
  %vm186 = vcmask 261120
  %v187 = vsel %vm186, %v185, 0.0
  %188 = vadd.xlane.f32.xlu0 %v187
  %v189 = vpop.xlane.xlu0 %188
  %v190 = vmul.f32 %v185, %v185
  %v191 = vsel %vm186, %v190, 0.0
  %192 = vadd.xlane.f32.xlu0 %v191
  %v193 = vpop.xlane.xlu0 %192
  %v194 = vmul.f32 %v189, 0.03125
  %v195 = vmul.f32 %v193, 0.03125
  %v196 = vmul.f32 %v194, %v194
  %v197 = vsub.f32 %v195, %v196
  %v198 = vsub.f32 %v185, %v194
  %v199 = vadd.f32 %v197, 1e-05
  %v200 = vrsqrt.pop %v199
  %v201 = vmul.f32 %v198, %v200
  %v202 = vlaneseq
  %v203 = vshrl.u32 %v202, 7
  %v204 = vsub.s32 1, %v203
  %v205 = vrot.slane %v22, %v204
  %v207 = vsel %vm186, %v201, 0
  %209 = vmatprep.subr.mxu0 0.0
  %210 = vmatpush1.msra.mxu0 %v18
  %211 = vmatprep.subr.mxu0 0.0
  %212 = vmatpush1.msra.mxu0 %v19
  %213 = vmatprep.subr.mxu0 0.0
  %214 = vmatpush1.msra.mxu0 %v20
  %215 = vmatprep.subr.mxu0 0.0
  %216 = vmatpush1.msra.mxu0 %v21
  %217 = vmatprep.subr.mxu0 0.0
  %218 = vmatpush1.msra.mxu0 0.0
  %219 = vmatprep.subr.mxu0 0.0
  %220 = vmatpush1.msra.mxu0 0.0
  %221 = vmatprep.subr.mxu0 0.0
  %222 = vmatpush1.msra.mxu0 0.0
  %223 = vmatprep.subr.mxu0 0.0
  %224 = vmatpush1.msra.mxu0 0.0
  %225 = vmatprep.subr.mxu0 0.0
  %226 = vmatpush1.msra.mxu0 0.0
  %227 = vmatprep.subr.mxu0 0.0
  %228 = vmatpush1.msra.mxu0 0.0
  %229 = vmatprep.subr.mxu0 0.0
  %230 = vmatpush1.msra.mxu0 0.0
  %231 = vmatprep.subr.mxu0 0.0
  %232 = vmatpush1.msra.mxu0 0.0
  %233 = vmatprep.subr.mxu0 0.0
  %234 = vmatpush1.msra.mxu0 0.0
  %235 = vmatprep.subr.mxu0 0.0
  %236 = vmatpush1.msra.mxu0 0.0
  %237 = vmatprep.subr.mxu0 0.0
  %238 = vmatpush1.msra.mxu0 0.0
  %239 = vmatprep.subr.mxu0 0.0
  %240 = vmatpush1.msra.mxu0 0.0
  %241 = vmatprep.subr.mxu0 0.0
  %242 = vmatpush1.msra.mxu0 0.0
  %243 = vmatprep.subr.mxu0 0.0
  %244 = vmatpush1.msra.mxu0 0.0
  %245 = vmatprep.subr.mxu0 0.0
  %246 = vmatpush1.msra.mxu0 0.0
  %247 = vmatprep.subr.mxu0 0.0
  %248 = vmatpush1.msra.mxu0 0.0
  %249 = vmatprep.subr.mxu0 0.0
  %250 = vmatpush1.msra.mxu0 0.0
  %251 = vmatprep.subr.mxu0 0.0
  %252 = vmatpush1.msra.mxu0 0.0
  %253 = vmatprep.subr.mxu0 0.0
  %254 = vmatpush1.msra.mxu0 0.0
  %255 = vmatprep.subr.mxu0 0.0
  %256 = vmatpush1.msra.mxu0 0.0
  %257 = vmatprep.subr.mxu0 0.0
  %258 = vmatpush1.msra.mxu0 0.0
  %259 = vmatprep.subr.mxu0 0.0
  %260 = vmatpush1.msra.mxu0 0.0
  %261 = vmatprep.subr.mxu0 0.0
  %262 = vmatpush1.msra.mxu0 0.0
  %263 = vmatprep.subr.mxu0 0.0
  %264 = vmatpush1.msra.mxu0 0.0
  %265 = vmatprep.subr.mxu0 0.0
  %266 = vmatpush1.msra.mxu0 0.0
  %267 = vmatprep.subr.mxu0 0.0
  %268 = vmatpush1.msra.mxu0 0.0
  %269 = vmatprep.subr.mxu0 0.0
  %270 = vmatpush1.msra.mxu0 0.0
  %271 = vmatprep.subr.mxu0 0.0
  %272 = vmatpush1.msra.mxu0 0.0
  %273 = vmatprep.mubr.f32.mxu0 0.0
  %274 = vmatmul.mubr.f32.gmra.mrb[0].mxu0 %v207
  %v275 = vpop.f32.mrb[0].mxu0
  %v276 = vadd.f32 %v205, %v275
  %v277 = vpop.f32.mrb[0].mxu0
  %278 = vdwg.mxu0
  %v279 = vmax.f32 %v276, 0.0
  %v280 = vlaneseq
  %v281 = vshrl.u32 %v280, 7
  %v282 = vsub.s32 2, %v281
  %v283 = vrot.slane %v22, %v282
  %v284 = vmul.f32 %v279, %v283
  %v285 = vsel %vm186, %v284, 0.0
  %286 = vadd.xlane.f32.xlu0 %v285
  %v287 = vpop.xlane.xlu0 %286
  %v288 = vlaneseq
  %v289 = vshrl.u32 %v288, 7
  %v290 = vsub.s32 3, %v289
  %v291 = vrot.slane %v22, %v290
  %v292 = vadd.f32 %v287, %v291
  %vm293 = vcmask 7168
  %294 = vst.msk [vmem:[%s3] sm:$0xff] %vm293, %v292
  // Predicated region
  $region14: #{tpu_custom_call.1} parent=0 // pred_check
    _
  $region15: #{tpu_custom_call.1} parent=0 // pred_check_branch
    %296 = sbr.rel (0) target = $region17
  $region16: #{tpu_custom_call.1} parent=0 // pred_region
    _
  $region17: #{tpu_custom_call.1} parent=0 // pred_fallthru
    _
  // Predicated region
  $region18: #{tpu_custom_call.1} parent=0 // pred_check
    _
  $region19: #{tpu_custom_call.1} parent=0 // pred_check_branch
    %298 = sbr.rel (0) target = $region21
  $region20: #{tpu_custom_call.1} parent=0 // pred_region
    _
  $region21: #{tpu_custom_call.1} parent=0 // pred_fallthru
    _

</llo_original>
